<compile_context>
chip_gen: v7x
topology: tpu7x:2x2x1
jax: 0.10.0
libtpu: 0.0.40
codegen_flags: <defaults>
</compile_context>

<pallas_src>
import jax
import jax.numpy as jnp
from jax.experimental import pallas as pl
from jax.experimental.pallas import tpu as pltpu

KERNEL_SIZE = 16
_PAD_R = (KERNEL_SIZE - 1) // 2          # 7 taps to the right (end padding)
_PAD_L = KERNEL_SIZE - 1 - _PAD_R        # 8 taps to the left  (front padding)
_LANE_OFF = 128                          # aligned lane offset of data in scratch


def _round_up(a, b):
    return (a + b - 1) // b * b


def _series_decomp_kernel(x_ref, res_ref, mean_ref, pad_ref):
    """One row tile: rows on sublanes, full (replicate-padded) time on lanes."""
    tile_r, T = x_ref.shape
    W = pad_ref.shape[-1]

    x = x_ref[...].astype(jnp.float32)                       # (tile_r, T)

    # Replicate-padded row in VMEM scratch (== PyTorch front/end padding):
    #   lanes [OFF-8, OFF)       <- x[:, 0]      (front pad)
    #   lanes [OFF, OFF+T)       <- x            (aligned store)
    #   lanes [OFF+T, OFF+T+7)   <- x[:, T-1]    (end pad)
    # Lanes outside [OFF-8, OFF+T+7) are never read by any valid output lane,
    # so they may hold stale scratch data.
    pad_ref[:, _LANE_OFF:_LANE_OFF + T] = x
    pad_ref[:, _LANE_OFF - _PAD_L:_LANE_OFF] = jnp.broadcast_to(
        x[:, 0:1], (tile_r, _PAD_L))
    pad_ref[:, _LANE_OFF + T:_LANE_OFF + T + _PAD_R] = jnp.broadcast_to(
        x[:, T - 1:T], (tile_r, _PAD_R))

    z = pad_ref[...]                                          # (tile_r, W) f32

    # 16-tap box sum via a log2 doubling tree (5 rolls on the XLU + 4 adds on
    # the VPU).  pltpu.roll(v, s)[j] == v[(j - s) mod W]; no wrap is ever read
    # for valid output lanes because of the >=8 / >=7 lane slack around data.
    s = z + pltpu.roll(z, shift=1, axis=1)                    # z[j-1 .. j]
    s = s + pltpu.roll(s, shift=2, axis=1)                    # z[j-3 .. j]
    s = s + pltpu.roll(s, shift=4, axis=1)                    # z[j-7 .. j]
    s = s + pltpu.roll(s, shift=8, axis=1)                    # z[j-15 .. j]
    s = pltpu.roll(s, shift=W - _PAD_R, axis=1)               # z[j-8 .. j+7]

    mean = s[:, _LANE_OFF:_LANE_OFF + T] * (1.0 / KERNEL_SIZE)
    # dec_layer (Linear(1,1)) + Softmax over a size-1 axis is identically 1.0
    # for this single-kernel configuration -> moving_mean == mean exactly.
    res_ref[...] = (x - mean).astype(res_ref.dtype)
    mean_ref[...] = mean.astype(mean_ref.dtype)


def series_decomp_multi(x, w=None, b=None, *, tile_r=None, vmem_budget_bytes=None):
    """x: (B, C, T).  w, b: Linear(1,1) params, accepted for API fidelity but
    mathematically irrelevant (softmax over a size-1 last axis is 1.0)."""
    del w, b
    B, C, T = x.shape
    R = B * C

    # Scratch row width: 128-aligned data offset + room for the 7-tap right
    # halo, rounded to a lane-dense multiple of 128.
    W = _LANE_OFF + _round_up(T + _PAD_R, 128)

    # Generation-aware VMEM budgeting (v7x has only 64 MiB physical VMEM).
    try:
        vmem_cap = int(pltpu.get_tpu_info().vmem_capacity_bytes)
    except Exception:
        vmem_cap = 64 * 1024 * 1024          # conservative fallback (v7x)
    vmem_limit = int(min(vmem_cap // 2, 64 * 1024 * 1024))
    budget = (vmem_budget_bytes if vmem_budget_bytes is not None
              else (vmem_limit * 3) // 4)    # headroom for Mosaic scratch

    itemsize = jnp.dtype(x.dtype).itemsize
    if tile_r is None:
        # Double-buffered input + two double-buffered outputs + f32 scratch
        # + ~4 live f32 temporaries of the scratch width.
        bytes_per_row = 2 * T * itemsize + 4 * T * itemsize + W * 4 + 4 * W * 4
        tile_r = max(8, min(budget // max(bytes_per_row, 1), 1024))
    # Keep several grid steps when there are enough rows: amortized pipelining
    # and lets the "parallel" row axis shard over v7x's two TensorCores.
    grid_target = 8 if R >= 64 else (2 if R >= 16 else 1)
    tile_r = min(tile_r, max(8, _round_up(pl.cdiv(R, grid_target), 8)))
    tile_r = _round_up(min(tile_r, _round_up(R, 8)), 8)

    # TODO(synk): lane-block T with an 8-left/7-right halo for extremely long
    # sequences (T ~ 100K+) where even an 8-row tile would exceed v7x VMEM.

    x2 = x.reshape(R, T)                     # free: merges contiguous leading dims
    grid = (pl.cdiv(R, tile_r),)

    res, mean = pl.pallas_call(
        _series_decomp_kernel,
        out_shape=(
            jax.ShapeDtypeStruct((R, T), x.dtype),
            jax.ShapeDtypeStruct((R, T), x.dtype),
        ),
        grid=grid,
        in_specs=[pl.BlockSpec((tile_r, T), lambda i: (i, 0))],
        out_specs=(
            pl.BlockSpec((tile_r, T), lambda i: (i, 0)),
            pl.BlockSpec((tile_r, T), lambda i: (i, 0)),
        ),
        scratch_shapes=[pltpu.VMEM((tile_r, W), jnp.float32)],
        compiler_params=pltpu.CompilerParams(
            dimension_semantics=("parallel",),
            vmem_limit_bytes=vmem_limit,
        ),
    )(x2)

    return res.reshape(B, C, T), mean.reshape(B, C, T)


def _reference(x, K=KERNEL_SIZE):
    """Pure-JAX reference mirroring the PyTorch forward exactly."""
    h = (K - 1) // 2
    f = K - 1 - h
    front = jnp.repeat(x[:, :, :1], f, axis=2)
    end = jnp.repeat(x[:, :, -1:], h, axis=2)
    padded = jnp.concatenate([front, x, end], axis=2)
    T = x.shape[2]
    mov = jnp.stack(
        [padded[:, :, t:t + K].mean(axis=2) for t in range(T)], axis=2)
    # Softmax over the singleton expanded dim is 1, so moving_mean == mov.
    return x - mov, mov


if __name__ == "__main__":
    key = jax.random.PRNGKey(0)
    # Deterministic Linear(1,1) params (provably no effect: size-1 softmax).
    w = jnp.array([[0.5]], dtype=jnp.float32)
    b = jnp.array([-0.25], dtype=jnp.float32)

    # Primary shape consistent with the module: (batch, channels, time).
    B, C, T = 2, 4, 16
    x = jax.random.normal(key, (B, C, T), dtype=jnp.float32)

    res, mean = series_decomp_multi(x, w, b)
    jax.block_until_ready((res, mean))

    res_ref, mean_ref = _reference(x)
    assert jnp.allclose(res, res_ref, atol=1e-5, rtol=1e-5)
    assert jnp.allclose(mean, mean_ref, atol=1e-5, rtol=1e-5)
    assert jnp.allclose(res + mean, x, atol=1e-5, rtol=1e-5)

    # Extra coverage: T < kernel_size, and T > 128 that is not a multiple of
    # 128 with a multi-step row grid (masked lane loads/stores, multi-vreg
    # rolls, two grid steps).
    for (b2, c2, t2) in ((2, 4, 5), (2, 8, 136)):
        xt = jax.random.normal(jax.random.PRNGKey(1), (b2, c2, t2), jnp.float32)
        r2, m2 = series_decomp_multi(xt, w, b)
        jax.block_until_ready((r2, m2))
        rr, mr = _reference(xt)
        assert jnp.allclose(r2, rr, atol=1e-5, rtol=1e-5)
        assert jnp.allclose(m2, mr, atol=1e-5, rtol=1e-5)

    print("KERNEL_OK")
</pallas_src>

<mosaic_0001>
module attributes {stable_mosaic.version = 11 : i64} {
  func.func @_series_decomp_kernel(%arg0: i32, %arg1: memref<8x16xf32, #tpu.memory_space<vmem>>, %arg2: memref<8x16xf32, #tpu.memory_space<vmem>>, %arg3: memref<8x16xf32, #tpu.memory_space<vmem>>, %arg4: memref<8x256xf32, #tpu.memory_space<vmem>>) attributes {dimension_semantics = [#tpu.dimension_semantics<parallel>], iteration_bounds = array<i64: 1>, scalar_prefetch = 0 : i64, scratch_operands = 1 : i64, tpu.core_type = #tpu.core_type<tc>, window_params = [{transform_indices = @transform_0, window_bounds = array<i64: 8, 16>}, {transform_indices = @transform_1, window_bounds = array<i64: 8, 16>}, {transform_indices = @transform_2, window_bounds = array<i64: 8, 16>}]} {
    %c0 = arith.constant 0 : index
    %c0_0 = arith.constant 0 : index
    %0 = vector.load %arg1[%c0, %c0_0] : memref<8x16xf32, #tpu.memory_space<vmem>>, vector<8x16xf32>
    %c0_1 = arith.constant 0 : index
    %c128 = arith.constant 128 : index
    %1 = vector.load %arg4[%c0_1, %c128] : memref<8x256xf32, #tpu.memory_space<vmem>>, vector<8x16xf32>
    tpu.vector_store %arg4[%c0_1, %c128], %0 {strides = array<i32>} : memref<8x256xf32, #tpu.memory_space<vmem>>, vector<8x16xf32>,
    %2 = vector.extract_strided_slice %0 {offsets = [0, 0], sizes = [8, 1], strides = [1, 1]} : vector<8x16xf32> to vector<8x1xf32>
    %3 = vector.shape_cast %2 : vector<8x1xf32> to vector<8x1xf32>
    %4 = vector.broadcast %3 : vector<8x1xf32> to vector<8x8xf32>
    %c0_2 = arith.constant 0 : index
    %c120 = arith.constant 120 : index
    %5 = vector.load %arg4[%c0_2, %c120] : memref<8x256xf32, #tpu.memory_space<vmem>>, vector<8x8xf32>
    tpu.vector_store %arg4[%c0_2, %c120], %4 {strides = array<i32>} : memref<8x256xf32, #tpu.memory_space<vmem>>, vector<8x8xf32>,
    %6 = vector.extract_strided_slice %0 {offsets = [0, 15], sizes = [8, 1], strides = [1, 1]} : vector<8x16xf32> to vector<8x1xf32>
    %7 = vector.shape_cast %6 : vector<8x1xf32> to vector<8x1xf32>
    %8 = vector.broadcast %7 : vector<8x1xf32> to vector<8x7xf32>
    %c0_3 = arith.constant 0 : index
    %c144 = arith.constant 144 : index
    %9 = vector.load %arg4[%c0_3, %c144] : memref<8x256xf32, #tpu.memory_space<vmem>>, vector<8x7xf32>
    tpu.vector_store %arg4[%c0_3, %c144], %8 {strides = array<i32>} : memref<8x256xf32, #tpu.memory_space<vmem>>, vector<8x7xf32>,
    %c0_4 = arith.constant 0 : index
    %c0_5 = arith.constant 0 : index
    %10 = vector.load %arg4[%c0_4, %c0_5] : memref<8x256xf32, #tpu.memory_space<vmem>>, vector<8x256xf32>
    %c1_i32 = arith.constant 1 : i32
    %11 = tpu.dynamic_rotate %10 by %c1_i32 dim 1 : vector<8x256xf32>, i32 -> vector<8x256xf32>
    %12 = arith.addf %10, %11 : vector<8x256xf32>
    %c2_i32 = arith.constant 2 : i32
    %13 = tpu.dynamic_rotate %12 by %c2_i32 dim 1 : vector<8x256xf32>, i32 -> vector<8x256xf32>
    %14 = arith.addf %12, %13 : vector<8x256xf32>
    %c4_i32 = arith.constant 4 : i32
    %15 = tpu.dynamic_rotate %14 by %c4_i32 dim 1 : vector<8x256xf32>, i32 -> vector<8x256xf32>
    %16 = arith.addf %14, %15 : vector<8x256xf32>
    %c8_i32 = arith.constant 8 : i32
    %17 = tpu.dynamic_rotate %16 by %c8_i32 dim 1 : vector<8x256xf32>, i32 -> vector<8x256xf32>
    %18 = arith.addf %16, %17 : vector<8x256xf32>
    %c249_i32 = arith.constant 249 : i32
    %19 = tpu.dynamic_rotate %18 by %c249_i32 dim 1 : vector<8x256xf32>, i32 -> vector<8x256xf32>
    %20 = vector.extract_strided_slice %19 {offsets = [0, 128], sizes = [8, 16], strides = [1, 1]} : vector<8x256xf32> to vector<8x16xf32>
    %cst = arith.constant 6.250000e-02 : f32
    %21 = vector.broadcast %cst : f32 to vector<8x16xf32>
    %22 = arith.mulf %20, %21 : vector<8x16xf32>
    %23 = arith.subf %0, %22 : vector<8x16xf32>
    %c0_6 = arith.constant 0 : index
    %c0_7 = arith.constant 0 : index
    %24 = vector.load %arg2[%c0_6, %c0_7] : memref<8x16xf32, #tpu.memory_space<vmem>>, vector<8x16xf32>
    tpu.vector_store %arg2[%c0_6, %c0_7], %23 {strides = array<i32>} : memref<8x16xf32, #tpu.memory_space<vmem>>, vector<8x16xf32>,
    %c0_8 = arith.constant 0 : index
    %c0_9 = arith.constant 0 : index
    %25 = vector.load %arg3[%c0_8, %c0_9] : memref<8x16xf32, #tpu.memory_space<vmem>>, vector<8x16xf32>
    tpu.vector_store %arg3[%c0_8, %c0_9], %22 {strides = array<i32>} : memref<8x16xf32, #tpu.memory_space<vmem>>, vector<8x16xf32>,
    return
  }
  func.func @transform_0(%arg0: i32) -> (i32, i32) {
    %c0_i32 = arith.constant 0 : i32
    %c0_i32_0 = arith.constant 0 : i32
    return %arg0, %c0_i32 : i32, i32
  }
  func.func @transform_1(%arg0: i32) -> (i32, i32) {
    %c0_i32 = arith.constant 0 : i32
    %c0_i32_0 = arith.constant 0 : i32
    return %arg0, %c0_i32 : i32, i32
  }
  func.func @transform_2(%arg0: i32) -> (i32, i32) {
    %c0_i32 = arith.constant 0 : i32
    %c0_i32_0 = arith.constant 0 : i32
    return %arg0, %c0_i32 : i32, i32
  }
}

</mosaic_0001>

<llo_original>
// kernel: tpu_custom_call.1
$region0: #{tpu_custom_call.1}
  #allocation0 [shape = 'u32[]', space=smem, size = 0x4, offset = 0x4, fixed_abs, tag = 'smem constant byte address 0x4 - core index']
  #allocation1 [shape = 'u32[144,128]{1,0:T(1,128)}', space=vmem, size = 0x12000, scoped, tag = 'internal scratch']
  #allocation2 [shape = 'f32[8,256]{1,0:T(8,128)}', space=vmem, size = 0x2000, scoped, tag = 'scratch operand']
  %s0 = inlined_call_operand.hbm [shape: f32[8,16], index: 0, kind: input, shape index: {}]
  %s1 = inlined_call_operand.hbm [shape: f32[8,16], index: 1, kind: output, shape index: {0}]
  %s2 = inlined_call_operand.hbm [shape: f32[8,16], index: 2, kind: output, shape index: {1}]
  %3 = xla_tuple %s1, %s2
  %s4 = sld [smem:[#allocation0]]
  $region26: #{tpu_custom_call.1} parent=0
    _
  %s6 = ssub.s32 1, %s4
  %s7 = scalar_select 0, %s6, %s4
  $region1: #{tpu_custom_call.1} parent=0
    #allocation3 [shape = 'u8[4096]{0}', space=vmem, size = 0x1000, scoped, tag = 'input window, operand 0, single buffered']
    #allocation4 [shape = 's32[1]{0}', space=sflag, size = 0x4, scoped, tag = 'scoped memory for tpu_custom_call.1']
    #allocation5 [shape = 's32[1]{0}', space=sflag, size = 0x4, scoped, tag = 'scoped memory for tpu_custom_call.1']
    #allocation6 [shape = 'u8[4096]{0}', space=vmem, size = 0x1000, scoped, tag = 'output window, operand 0, single buffered']
    #allocation7 [shape = 'u8[4096]{0}', space=vmem, size = 0x1000, scoped, tag = 'output window, operand 1, single buffered']
    #allocation8 [shape = 's32[1]{0}', space=sflag, size = 0x4, scoped, tag = 'scoped memory for tpu_custom_call.1']
    %8 = vsyncpa [#allocation4], 0
    %9 = vsyncpa [#allocation5], 0
    %10 = vsyncpa [#allocation8], 0
    // Predicated region
    $region2: #{tpu_custom_call.1} parent=1 // pred_check
      _
    $region3: #{tpu_custom_call.1} parent=1 // pred_check_branch
      %12 = sbr.rel (0) target = $region5
    $region4: #{tpu_custom_call.1} parent=1 // pred_region
      %s14 = ssub.s32 128, 128
      %15 = vsyncadd [#allocation4], %s14
      %s17 = sshll.u32 [#allocation3], 4
      %s18 = int_to_ptr.vmem [resolvable:$true] %s17
      %20 = dma.hbm_to_vmem [thread:$0]  %s0, 128, %s18, [#allocation4]
    $region5: #{tpu_custom_call.1} parent=1 // pred_fallthru
      _
    // Predicated region
    $region6: #{tpu_custom_call.1} parent=1 // pred_check
      _
    $region7: #{tpu_custom_call.1} parent=1 // pred_check_branch
      %22 = sbr.rel (0) target = $region9
    $region8: #{tpu_custom_call.1} parent=1 // pred_region
      %23 = dma.done [#allocation4], 128
    $region9: #{tpu_custom_call.1} parent=1 // pred_fallthru
      _
    %v24 = vld [vmem:[#allocation3] sm:$0xff]
    %vm25 = vcmask 130048
    %26 = vst.msk [vmem:[#allocation2 + $0x8] sm:$0xff] %vm25, %v24
    %28 = vset.pattern.permute.xlu0 0
    %29 = vperm.xlu0 %28, %v24
    %v30 = vpop.permute.xlu0 %29
    %vm32 = vcmask 1048512
    %33 = vst.msk [vmem:[#allocation2] sm:$0xff] %vm32, %v30
    %34 = vset.pattern.permute.xlu0 15
    %35 = vperm.xlu0 %34, %v24
    %v36 = vpop.permute.xlu0 %35
    %vm38 = vcmask 187520
    %39 = vst.msk [vmem:[#allocation2 + $0x8] sm:$0xff] %vm38, %v36
    %v40 = vld [vmem:[#allocation2] sm:$0xff]
    %v41 = vld [vmem:[#allocation2 + $0x8] sm:$0xff]
    %42 = vrot.lane.b32.xlu0 %v40, 1
    %v43 = vpop.permute.xlu0 %42
    %44 = vrot.lane.b32.xlu0 %v41, 1
    %v45 = vpop.permute.xlu0 %44
    %v46 = vlaneseq
    %v47 = vand.u32 %v46, 127
    %vm48 = vcmp.lt.s32.totalorder %v47, 1
    %v49 = vsel %vm48, %v43, %v45
    %v50 = vsel %vm48, %v45, %v43
    %v51 = vadd.f32 %v40, %v50
    %v52 = vadd.f32 %v41, %v49
    %53 = vrot.lane.b32.xlu0 %v51, 2
    %v54 = vpop.permute.xlu0 %53
    %55 = vrot.lane.b32.xlu0 %v52, 2
    %v56 = vpop.permute.xlu0 %55
    %vm57 = vcmp.lt.s32.totalorder %v47, 2
    %v58 = vsel %vm57, %v54, %v56
    %v59 = vsel %vm57, %v56, %v54
    %v60 = vadd.f32 %v51, %v59
    %v61 = vadd.f32 %v52, %v58
    %62 = vrot.lane.b32.xlu0 %v60, 4
    %v63 = vpop.permute.xlu0 %62
    %64 = vrot.lane.b32.xlu0 %v61, 4
    %v65 = vpop.permute.xlu0 %64
    %vm66 = vcmp.lt.s32.totalorder %v47, 4
    %v67 = vsel %vm66, %v63, %v65
    %v68 = vsel %vm66, %v65, %v63
    %v69 = vadd.f32 %v60, %v68
    %v70 = vadd.f32 %v61, %v67
    %71 = vrot.lane.b32.xlu0 %v69, 8
    %v72 = vpop.permute.xlu0 %71
    %73 = vrot.lane.b32.xlu0 %v70, 8
    %v74 = vpop.permute.xlu0 %73
    %vm75 = vcmp.lt.s32.totalorder %v47, 8
    %v76 = vsel %vm75, %v72, %v74
    %v77 = vsel %vm75, %v74, %v72
    %v78 = vadd.f32 %v69, %v77
    %v79 = vadd.f32 %v70, %v76
    %80 = vrot.lane.b32.xlu0 %v78, 121
    %v81 = vpop.permute.xlu0 %80
    %82 = vrot.lane.b32.xlu0 %v79, 121
    %v83 = vpop.permute.xlu0 %82
    %vm84 = vcmp.lt.s32.totalorder %v47, 121
    %v85 = vsel %vm84, %v83, %v81
    %v86 = vmul.f32 %v85, 0.0625
    %v87 = vsub.f32 %v24, %v86
    %88 = vst.msk [vmem:[#allocation6] sm:$0xff] %vm25, %v87
    %89 = vst.msk [vmem:[#allocation7] sm:$0xff] %vm25, %v86
    // Predicated region
    $region10: #{tpu_custom_call.1} parent=1 // pred_check
      _
    $region11: #{tpu_custom_call.1} parent=1 // pred_check_branch
      %91 = sbr.rel (0) target = $region13
    $region12: #{tpu_custom_call.1} parent=1 // pred_region
      %s93 = ssub.s32 128, 128
      %94 = vsyncadd [#allocation5], %s93
      %s96 = sshll.u32 [#allocation6], 4
      %s97 = int_to_ptr.vmem [resolvable:$true] %s96
      %99 = dma.vmem_to_hbm [thread:$0]  %s97, 128, %s1, [#allocation5]
    $region13: #{tpu_custom_call.1} parent=1 // pred_fallthru
      _
    // Predicated region
    $region14: #{tpu_custom_call.1} parent=1 // pred_check
      _
    $region15: #{tpu_custom_call.1} parent=1 // pred_check_branch
      %101 = sbr.rel (0) target = $region17
    $region16: #{tpu_custom_call.1} parent=1 // pred_region
      %s103 = ssub.s32 128, 128
      %104 = vsyncadd [#allocation8], %s103
      %s106 = sshll.u32 [#allocation7], 4
      %s107 = int_to_ptr.vmem [resolvable:$true] %s106
      %109 = dma.vmem_to_hbm [thread:$0]  %s107, 128, %s2, [#allocation8]
    $region17: #{tpu_custom_call.1} parent=1 // pred_fallthru
      _
    // Predicated region
    $region18: #{tpu_custom_call.1} parent=1 // pred_check
      _
    $region19: #{tpu_custom_call.1} parent=1 // pred_check_branch
      %111 = sbr.rel (0) target = $region21
    $region20: #{tpu_custom_call.1} parent=1 // pred_region
      %112 = dma.done [#allocation5], 128
    $region21: #{tpu_custom_call.1} parent=1 // pred_fallthru
      _
    // Predicated region
    $region22: #{tpu_custom_call.1} parent=1 // pred_check
      _
    $region23: #{tpu_custom_call.1} parent=1 // pred_check_branch
      %114 = sbr.rel (0) target = $region25
    $region24: #{tpu_custom_call.1} parent=1 // pred_region
      %115 = dma.done [#allocation8], 128
    $region25: #{tpu_custom_call.1} parent=1 // pred_fallthru
      _
    %116 = vsyncpa [#allocation4], 1
    %117 = vsyncpa [#allocation5], 1
    %118 = vsyncpa [#allocation8], 1

</llo_original>
